<compile_context>
chip_gen: v5e
topology: v5e:2x2
jax: 0.10.0
libtpu: 0.0.40
codegen_flags: <defaults>
</compile_context>

<pallas_src>
import functools

import jax
import jax.numpy as jnp
from jax.experimental import pallas as pl
from jax.experimental.pallas import tpu as pltpu

N_OUT = 2        # logits of the RMTS classifier
SUBLANE = 8      # f32 sublane pack / min batch-tile granularity
BF16_PACK = 16   # bf16 sublane pack used for the hidden dim


def _round_up(x, m):
    return ((x + m - 1) // m) * m


# ---------------------------------------------------------------------------
# Kernel
# ---------------------------------------------------------------------------
def _mlp_kernel(src_ref, t1_ref, t2_ref,
                w1s_ref, w1a_ref, w1b_ref, b1_ref,
                w2_ref, b2_ref, o_ref):
    # fc1 as split-K accumulation over the three coherence vectors
    # (replaces the concat): bf16 MXU inputs, f32 accumulation.
    h = jnp.dot(src_ref[...].astype(jnp.bfloat16), w1s_ref[...],
                preferred_element_type=jnp.float32)
    h = h + jnp.dot(t1_ref[...].astype(jnp.bfloat16), w1a_ref[...],
                    preferred_element_type=jnp.float32)
    h = h + jnp.dot(t2_ref[...].astype(jnp.bfloat16), w1b_ref[...],
                    preferred_element_type=jnp.float32)
    # bias + ReLU epilogue in f32 on the MXU accumulator (safe on v5e too).
    h = jnp.maximum(h + b1_ref[...], 0.0)
    # fc2: narrow (H_pad, N_OUT) weight — output stays at its logical width,
    # so the store is a tiny 2-lane masked vst instead of a padded 128 slab.
    y = jnp.dot(h.astype(jnp.bfloat16), w2_ref[...],
                preferred_element_type=jnp.float32)
    o_ref[...] = (y + b2_ref[...]).astype(o_ref.dtype)


# ---------------------------------------------------------------------------
# Parameter construction / packing
# ---------------------------------------------------------------------------
def init_params(key, coherence_dim, hidden_dim=64, dtype=jnp.float32):
    """PyTorch nn.Linear-style init: U(-1/sqrt(fan_in), 1/sqrt(fan_in))."""
    in1 = 3 * coherence_dim
    k1, k2, k3, k4 = jax.random.split(key, 4)
    bound1 = 1.0 / float(in1) ** 0.5
    bound2 = 1.0 / float(hidden_dim) ** 0.5
    # logical (unpadded, f32) params; weights stored as (in, out)
    w1 = jax.random.uniform(k1, (in1, hidden_dim), dtype, -bound1, bound1)
    b1 = jax.random.uniform(k2, (hidden_dim,), dtype, -bound1, bound1)
    w2 = jax.random.uniform(k3, (hidden_dim, N_OUT), dtype, -bound2, bound2)
    b2 = jax.random.uniform(k4, (N_OUT,), dtype, -bound2, bound2)
    return {"w1": w1, "b1": b1, "w2": w2, "b2": b2}


def pack_params(params, coherence_dim, compute_dtype=jnp.bfloat16):
    """One-time: split W1 per input chunk, pad hidden dim only to the bf16
    sublane pack (16), keep N_OUT=2 output columns (no 128 padding), cast
    matmul operands to bf16 (biases stay f32 for the f32 epilogue)."""
    w1, b1, w2, b2 = params["w1"], params["b1"], params["w2"], params["b2"]
    C = coherence_dim
    H = w1.shape[1]
    H_pad = _round_up(H, BF16_PACK)   # 32 -> 32, 64 -> 64, 50 -> 64, ...

    def pad_cols(a, n):
        return jnp.pad(a, ((0, 0), (0, n - a.shape[1])))

    return {
        "w1_src": pad_cols(w1[0 * C:1 * C], H_pad).astype(compute_dtype),
        "w1_t1":  pad_cols(w1[1 * C:2 * C], H_pad).astype(compute_dtype),
        "w1_t2":  pad_cols(w1[2 * C:3 * C], H_pad).astype(compute_dtype),
        "b1":     pad_cols(b1[None, :], H_pad).astype(jnp.float32),
        # zero rows for the padded hidden units: ReLU(0) * 0 == 0, no effect.
        "w2":     jnp.pad(w2, ((0, H_pad - H), (0, 0))).astype(compute_dtype),
        "b2":     b2[None, :].astype(jnp.float32),
    }


# ---------------------------------------------------------------------------
# Forward
# ---------------------------------------------------------------------------
@functools.partial(jax.jit, static_argnames=("batch_tile",))
def rmts_classifier_forward(src_vec, t1_vec, t2_vec, packed, *,
                            batch_tile=8192):
    """Pallas equivalent of BaselineRMTSClassifier.forward -> (B, 2) logits."""
    B, C = src_vec.shape
    H_pad = packed["w1_src"].shape[1]
    n_out = packed["w2"].shape[1]            # == N_OUT (no output padding)

    # ---- batch tile selection -------------------------------------------
    # * tiny B: single full-array block (exempt from the (8,128) rule).
    # * otherwise: at least 2 grid steps (so "parallel" shards across both
    #   TensorCores on v7x), capped at batch_tile; tiles stay multiples of 8.
    #   Per-step double-buffered VMEM at TB=8192, C=16: ~3 MiB — comfortably
    #   inside the 16 MiB v5e scoped default, no vmem_limit_bytes needed.
    bt = max(SUBLANE, (int(batch_tile) // SUBLANE) * SUBLANE)
    if B <= 2 * SUBLANE:
        TB = B
    else:
        TB = min(bt, _round_up(pl.cdiv(B, 2), SUBLANE))
    grid = (pl.cdiv(B, TB),)

    act_spec = pl.BlockSpec((TB, C), lambda i: (i, 0))
    # index_map -> (0, 0): weights/biases stay VMEM-resident across grid steps.
    res = lambda shape: pl.BlockSpec(shape, lambda i: (0, 0))

    flops = 2 * B * (3 * C * H_pad + H_pad * n_out)
    bytes_accessed = (
        3 * B * C * src_vec.dtype.itemsize
        + sum(int(v.size) * v.dtype.itemsize for v in packed.values())
        + B * n_out * 4
    )

    out = pl.pallas_call(
        _mlp_kernel,
        out_shape=jax.ShapeDtypeStruct((B, n_out), jnp.float32),
        grid=grid,
        in_specs=[
            act_spec, act_spec, act_spec,          # src, t1, t2 (no concat)
            res((C, H_pad)), res((C, H_pad)), res((C, H_pad)),   # W1 chunks
            res((1, H_pad)),                       # b1
            res((H_pad, n_out)),                   # W2 (narrow, unpadded out)
            res((1, n_out)),                       # b2
        ],
        # last dim == full array dim -> exempt from 128-divisibility; no
        # wrapper slice pass needed afterwards.
        out_specs=pl.BlockSpec((TB, n_out), lambda i: (i, 0)),
        compiler_params=pltpu.CompilerParams(
            dimension_semantics=("parallel",),     # megacore / v7x dual-TC
        ),
        cost_estimate=pl.CostEstimate(
            flops=flops, transcendentals=0, bytes_accessed=bytes_accessed),
    )(src_vec, t1_vec, t2_vec,
      packed["w1_src"], packed["w1_t1"], packed["w1_t2"], packed["b1"],
      packed["w2"], packed["b2"])

    return out                                   # already (B, 2) logits


# ---------------------------------------------------------------------------
# References (pure JAX)
# ---------------------------------------------------------------------------
def reference_forward_f32(src_vec, t1_vec, t2_vec, params):
    x = jnp.concatenate([src_vec, t1_vec, t2_vec], axis=1)
    h = jnp.maximum(x @ params["w1"] + params["b1"], 0.0)
    return h @ params["w2"] + params["b2"]


def reference_forward_bf16(src_vec, t1_vec, t2_vec, params):
    """Emulates the kernel's numerics: bf16 MXU inputs, f32 accumulation."""
    x = jnp.concatenate([src_vec, t1_vec, t2_vec], axis=1).astype(jnp.bfloat16)
    h = jnp.dot(x, params["w1"].astype(jnp.bfloat16),
                preferred_element_type=jnp.float32) + params["b1"]
    h = jnp.maximum(h, 0.0)
    return jnp.dot(h.astype(jnp.bfloat16), params["w2"].astype(jnp.bfloat16),
                   preferred_element_type=jnp.float32) + params["b2"]


# ---------------------------------------------------------------------------
if __name__ == "__main__":
    coherence_dim = 16
    hidden_dim = 32

    key = jax.random.PRNGKey(0)
    kp, ks = jax.random.split(key, 2)

    params = init_params(kp, coherence_dim, hidden_dim)
    packed = pack_params(params, coherence_dim)

    def run_case(batch, batch_tile):
        kk = jax.random.fold_in(ks, batch)
        ka, kb, kc = jax.random.split(kk, 3)
        src = jax.random.normal(ka, (batch, coherence_dim), jnp.float32)
        t1 = jax.random.normal(kb, (batch, coherence_dim), jnp.float32)
        t2 = jax.random.normal(kc, (batch, coherence_dim), jnp.float32)

        logits = rmts_classifier_forward(src, t1, t2, packed,
                                         batch_tile=batch_tile)
        logits = jax.block_until_ready(logits)
        assert logits.shape == (batch, N_OUT)

        ref_bf16 = reference_forward_bf16(src, t1, t2, params)
        ref_f32 = reference_forward_f32(src, t1, t2, params)
        assert jnp.allclose(logits, ref_bf16, atol=2e-3, rtol=2e-3), \
            f"bf16-emulated mismatch at batch={batch}"
        assert jnp.allclose(logits, ref_f32, atol=5e-2, rtol=5e-2), \
            f"f32 reference mismatch at batch={batch}"

    # Small single-block case (matches the module's toy usage).
    run_case(batch=2, batch_tile=8192)
    # Gridded + partial-last-block case (exercises pipelining & masked rows).
    run_case(batch=50, batch_tile=16)
    # Default tile path: >= 2 grid steps via the cdiv(B, 2) split (v7x dual-TC).
    run_case(batch=200, batch_tile=8192)

    print("KERNEL_OK")
</pallas_src>

<mosaic_0001>
module attributes {stable_mosaic.version = 11 : i64} {
  func.func @_mlp_kernel(%arg0: i32, %arg1: memref<2x16xf32, #tpu.memory_space<vmem>>, %arg2: memref<2x16xf32, #tpu.memory_space<vmem>>, %arg3: memref<2x16xf32, #tpu.memory_space<vmem>>, %arg4: memref<16x32xbf16, #tpu.memory_space<vmem>>, %arg5: memref<16x32xbf16, #tpu.memory_space<vmem>>, %arg6: memref<16x32xbf16, #tpu.memory_space<vmem>>, %arg7: memref<1x32xf32, #tpu.memory_space<vmem>>, %arg8: memref<32x2xbf16, #tpu.memory_space<vmem>>, %arg9: memref<1x2xf32, #tpu.memory_space<vmem>>, %arg10: memref<2x2xf32, #tpu.memory_space<vmem>>) attributes {dimension_semantics = [#tpu.dimension_semantics<parallel>], iteration_bounds = array<i64: 1>, scalar_prefetch = 0 : i64, scratch_operands = 0 : i64, tpu.core_type = #tpu.core_type<tc>, window_params = [{transform_indices = @transform_0, window_bounds = array<i64: 2, 16>}, {transform_indices = @transform_1, window_bounds = array<i64: 2, 16>}, {transform_indices = @transform_2, window_bounds = array<i64: 2, 16>}, {pipeline_mode = #tpu.pipeline_mode<synchronous>, transform_indices = @transform_3, window_bounds = array<i64: 16, 32>}, {pipeline_mode = #tpu.pipeline_mode<synchronous>, transform_indices = @transform_4, window_bounds = array<i64: 16, 32>}, {pipeline_mode = #tpu.pipeline_mode<synchronous>, transform_indices = @transform_5, window_bounds = array<i64: 16, 32>}, {pipeline_mode = #tpu.pipeline_mode<synchronous>, transform_indices = @transform_6, window_bounds = array<i64: 1, 32>}, {pipeline_mode = #tpu.pipeline_mode<synchronous>, transform_indices = @transform_7, window_bounds = array<i64: 32, 2>}, {pipeline_mode = #tpu.pipeline_mode<synchronous>, transform_indices = @transform_8, window_bounds = array<i64: 1, 2>}, {transform_indices = @transform_9, window_bounds = array<i64: 2, 2>}]} {
    %c0 = arith.constant 0 : index
    %c0_0 = arith.constant 0 : index
    %0 = vector.load %arg1[%c0, %c0_0] : memref<2x16xf32, #tpu.memory_space<vmem>>, vector<2x16xf32>
    %1 = arith.truncf %0 : vector<2x16xf32> to vector<2x16xbf16>
    %c0_1 = arith.constant 0 : index
    %c0_2 = arith.constant 0 : index
    %2 = vector.load %arg4[%c0_1, %c0_2] : memref<16x32xbf16, #tpu.memory_space<vmem>>, vector<16x32xbf16>
    %cst = arith.constant dense<0.000000e+00> : vector<2x32xf32>
    %3 = tpu.matmul %1, %2, %cst {dimension_numbers = #tpu.dot_dimension_numbers<[1], [0], [0], [1], [0, 0, 1, 1], [], []>} : vector<2x16xbf16>, vector<16x32xbf16>, vector<2x32xf32> -> vector<2x32xf32>
    %c0_3 = arith.constant 0 : index
    %c0_4 = arith.constant 0 : index
    %4 = vector.load %arg2[%c0_3, %c0_4] : memref<2x16xf32, #tpu.memory_space<vmem>>, vector<2x16xf32>
    %5 = arith.truncf %4 : vector<2x16xf32> to vector<2x16xbf16>
    %c0_5 = arith.constant 0 : index
    %c0_6 = arith.constant 0 : index
    %6 = vector.load %arg5[%c0_5, %c0_6] : memref<16x32xbf16, #tpu.memory_space<vmem>>, vector<16x32xbf16>
    %cst_7 = arith.constant dense<0.000000e+00> : vector<2x32xf32>
    %7 = tpu.matmul %5, %6, %cst_7 {dimension_numbers = #tpu.dot_dimension_numbers<[1], [0], [0], [1], [0, 0, 1, 1], [], []>} : vector<2x16xbf16>, vector<16x32xbf16>, vector<2x32xf32> -> vector<2x32xf32>
    %8 = arith.addf %3, %7 : vector<2x32xf32>
    %c0_8 = arith.constant 0 : index
    %c0_9 = arith.constant 0 : index
    %9 = vector.load %arg3[%c0_8, %c0_9] : memref<2x16xf32, #tpu.memory_space<vmem>>, vector<2x16xf32>
    %10 = arith.truncf %9 : vector<2x16xf32> to vector<2x16xbf16>
    %c0_10 = arith.constant 0 : index
    %c0_11 = arith.constant 0 : index
    %11 = vector.load %arg6[%c0_10, %c0_11] : memref<16x32xbf16, #tpu.memory_space<vmem>>, vector<16x32xbf16>
    %cst_12 = arith.constant dense<0.000000e+00> : vector<2x32xf32>
    %12 = tpu.matmul %10, %11, %cst_12 {dimension_numbers = #tpu.dot_dimension_numbers<[1], [0], [0], [1], [0, 0, 1, 1], [], []>} : vector<2x16xbf16>, vector<16x32xbf16>, vector<2x32xf32> -> vector<2x32xf32>
    %13 = arith.addf %8, %12 : vector<2x32xf32>
    %c0_13 = arith.constant 0 : index
    %c0_14 = arith.constant 0 : index
    %14 = vector.load %arg7[%c0_13, %c0_14] : memref<1x32xf32, #tpu.memory_space<vmem>>, vector<1x32xf32>
    %15 = vector.broadcast %14 : vector<1x32xf32> to vector<2x32xf32>
    %16 = arith.addf %13, %15 : vector<2x32xf32>
    %cst_15 = arith.constant 0.000000e+00 : f32
    %17 = vector.broadcast %cst_15 : f32 to vector<2x32xf32>
    %18 = arith.maximumf %16, %17 : vector<2x32xf32>
    %19 = arith.truncf %18 : vector<2x32xf32> to vector<2x32xbf16>
    %c0_16 = arith.constant 0 : index
    %c0_17 = arith.constant 0 : index
    %20 = vector.load %arg8[%c0_16, %c0_17] : memref<32x2xbf16, #tpu.memory_space<vmem>>, vector<32x2xbf16>
    %cst_18 = arith.constant dense<0.000000e+00> : vector<2x2xf32>
    %21 = tpu.matmul %19, %20, %cst_18 {dimension_numbers = #tpu.dot_dimension_numbers<[1], [0], [0], [1], [0, 0, 1, 1], [], []>} : vector<2x32xbf16>, vector<32x2xbf16>, vector<2x2xf32> -> vector<2x2xf32>
    %c0_19 = arith.constant 0 : index
    %c0_20 = arith.constant 0 : index
    %22 = vector.load %arg9[%c0_19, %c0_20] : memref<1x2xf32, #tpu.memory_space<vmem>>, vector<1x2xf32>
    %23 = vector.broadcast %22 : vector<1x2xf32> to vector<2x2xf32>
    %24 = arith.addf %21, %23 : vector<2x2xf32>
    %c0_21 = arith.constant 0 : index
    %c0_22 = arith.constant 0 : index
    %25 = vector.load %arg10[%c0_21, %c0_22] : memref<2x2xf32, #tpu.memory_space<vmem>>, vector<2x2xf32>
    tpu.vector_store %arg10[%c0_21, %c0_22], %24 {strides = array<i32>} : memref<2x2xf32, #tpu.memory_space<vmem>>, vector<2x2xf32>,
    return
  }
  func.func @transform_0(%arg0: i32) -> (i32, i32) {
    %c0_i32 = arith.constant 0 : i32
    %c0_i32_0 = arith.constant 0 : i32
    return %arg0, %c0_i32 : i32, i32
  }
  func.func @transform_1(%arg0: i32) -> (i32, i32) {
    %c0_i32 = arith.constant 0 : i32
    %c0_i32_0 = arith.constant 0 : i32
    return %arg0, %c0_i32 : i32, i32
  }
  func.func @transform_2(%arg0: i32) -> (i32, i32) {
    %c0_i32 = arith.constant 0 : i32
    %c0_i32_0 = arith.constant 0 : i32
    return %arg0, %c0_i32 : i32, i32
  }
  func.func @transform_3(%arg0: i32) -> (i32, i32) {
    %c0_i32 = arith.constant 0 : i32
    %c0_i32_0 = arith.constant 0 : i32
    %c0_i32_1 = arith.constant 0 : i32
    return %c0_i32, %c0_i32_0 : i32, i32
  }
  func.func @transform_4(%arg0: i32) -> (i32, i32) {
    %c0_i32 = arith.constant 0 : i32
    %c0_i32_0 = arith.constant 0 : i32
    %c0_i32_1 = arith.constant 0 : i32
    return %c0_i32, %c0_i32_0 : i32, i32
  }
  func.func @transform_5(%arg0: i32) -> (i32, i32) {
    %c0_i32 = arith.constant 0 : i32
    %c0_i32_0 = arith.constant 0 : i32
    %c0_i32_1 = arith.constant 0 : i32
    return %c0_i32, %c0_i32_0 : i32, i32
  }
  func.func @transform_6(%arg0: i32) -> (i32, i32) {
    %c0_i32 = arith.constant 0 : i32
    %c0_i32_0 = arith.constant 0 : i32
    %c0_i32_1 = arith.constant 0 : i32
    return %c0_i32, %c0_i32_0 : i32, i32
  }
  func.func @transform_7(%arg0: i32) -> (i32, i32) {
    %c0_i32 = arith.constant 0 : i32
    %c0_i32_0 = arith.constant 0 : i32
    %c0_i32_1 = arith.constant 0 : i32
    return %c0_i32, %c0_i32_0 : i32, i32
  }
  func.func @transform_8(%arg0: i32) -> (i32, i32) {
    %c0_i32 = arith.constant 0 : i32
    %c0_i32_0 = arith.constant 0 : i32
    %c0_i32_1 = arith.constant 0 : i32
    return %c0_i32, %c0_i32_0 : i32, i32
  }
  func.func @transform_9(%arg0: i32) -> (i32, i32) {
    %c0_i32 = arith.constant 0 : i32
    %c0_i32_0 = arith.constant 0 : i32
    return %arg0, %c0_i32 : i32, i32
  }
}

</mosaic_0001>

<llo_original>
// kernel: rmts_classifier_forward.1
$region0: #{rmts_classifier_forward.1}
  #allocation0 [shape = 'u32[]', space=smem, size = 0x4, offset = 0x4, fixed_abs, tag = 'smem constant byte address 0x4 - core index']
  #allocation1 [shape = 'u32[72,128]{1,0:T(1,128)}', space=vmem, size = 0x9000, scoped, tag = 'internal scratch']
  %s0 = inlined_call_operand.hbm [shape: f32[2,16], index: 0, kind: input, shape index: {}]
  %s1 = inlined_call_operand.hbm [shape: f32[2,16], index: 1, kind: input, shape index: {}]
  %s2 = inlined_call_operand.vmem [shape: f32[2,16], index: 2, kind: input, shape index: {}]
  %s3 = inlined_call_operand.vmem [shape: bf16[16,32], index: 3, kind: input, shape index: {}]
  %s4 = inlined_call_operand.vmem [shape: bf16[16,32], index: 4, kind: input, shape index: {}]
  %s5 = inlined_call_operand.hbm [shape: bf16[16,32], index: 5, kind: input, shape index: {}]
  %s6 = inlined_call_operand.vmem [shape: f32[1,32], index: 6, kind: input, shape index: {}]
  %s7 = inlined_call_operand.vmem [shape: bf16[32,2], index: 7, kind: input, shape index: {}]
  %s8 = inlined_call_operand.vmem [shape: f32[1,2], index: 8, kind: input, shape index: {}]
  %s9 = inlined_call_operand.hbm [shape: f32[2,2], index: 9, kind: output, shape index: {}]
  %s10 = sld [smem:[#allocation0]]
  $region58: #{rmts_classifier_forward.1} parent=0
    _
  %s12 = ssub.s32 1, %s10
  %s13 = scalar_select 0, %s12, %s10
  $region1: #{rmts_classifier_forward.1} parent=0
    #allocation2 [shape = 'u8[1024]{0}', space=vmem, size = 0x400, scoped, tag = 'input window, operand 0, single buffered']
    #allocation3 [shape = 's32[1]{0}', space=sflag, size = 0x4, scoped, tag = 'scoped memory for rmts_classifier_forward.1']
    #allocation4 [shape = 's32[1]{0}', space=sflag, size = 0x4, scoped, tag = 'scoped memory for rmts_classifier_forward.1']
    #allocation5 [shape = 'u8[1024]{0}', space=vmem, size = 0x400, scoped, tag = 'input window, operand 1, single buffered']
    #allocation6 [shape = 's32[1]{0}', space=sflag, size = 0x4, scoped, tag = 'scoped memory for rmts_classifier_forward.1']
    #allocation7 [shape = 'u8[4096]{0}', space=vmem, size = 0x1000, scoped, tag = 'input window, operand 5, single buffered']
    #allocation8 [shape = 'u8[1024]{0}', space=vmem, size = 0x400, scoped, tag = 'output window, operand 0, single buffered']
    %14 = vsyncpa [#allocation3], 0
    %15 = vsyncpa [#allocation6], 0
    %16 = vsyncpa [#allocation4], 0
    // Predicated region
    $region2: #{rmts_classifier_forward.1} parent=1 // pred_check
      _
    $region3: #{rmts_classifier_forward.1} parent=1 // pred_check_branch
      %18 = sbr.rel (0) target = $region5
    $region4: #{rmts_classifier_forward.1} parent=1 // pred_region
      %20 = vsyncadd [#allocation3], 0
      %s22 = sshll.u32 %s0, 4
      %s23 = int_to_ptr.hbm [resolvable:$true] %s22
      %s24 = sshll.u32 [#allocation2], 4
      %s25 = int_to_ptr.vmem [resolvable:$true] %s24
      %27 = dma.hbm_to_vmem [thread:$0]  %s23, 32, %s25, [#allocation3]
    $region5: #{rmts_classifier_forward.1} parent=1 // pred_fallthru
      _
    // Predicated region
    $region6: #{rmts_classifier_forward.1} parent=1 // pred_check
      _
    $region7: #{rmts_classifier_forward.1} parent=1 // pred_check_branch
      %29 = sbr.rel (0) target = $region9
    $region8: #{rmts_classifier_forward.1} parent=1 // pred_region
      %31 = vsyncadd [#allocation6], 0
      %s33 = sshll.u32 %s1, 4
      %s34 = int_to_ptr.hbm [resolvable:$true] %s33
      %s35 = sshll.u32 [#allocation5], 4
      %s36 = int_to_ptr.vmem [resolvable:$true] %s35
      %38 = dma.hbm_to_vmem [thread:$0]  %s34, 32, %s36, [#allocation6]
    $region9: #{rmts_classifier_forward.1} parent=1 // pred_fallthru
      _
    // Predicated region
    $region10: #{rmts_classifier_forward.1} parent=1 // pred_check
      _
    $region11: #{rmts_classifier_forward.1} parent=1 // pred_check_branch
      %40 = sbr.rel (0) target = $region13
    $region12: #{rmts_classifier_forward.1} parent=1 // pred_region
      _
    $region13: #{rmts_classifier_forward.1} parent=1 // pred_fallthru
      _
    // Predicated region
    $region14: #{rmts_classifier_forward.1} parent=1 // pred_check
      _
    $region15: #{rmts_classifier_forward.1} parent=1 // pred_check_branch
      %42 = sbr.rel (0) target = $region17
    $region16: #{rmts_classifier_forward.1} parent=1 // pred_region
      _
    $region17: #{rmts_classifier_forward.1} parent=1 // pred_fallthru
      _
    // Predicated region
    $region18: #{rmts_classifier_forward.1} parent=1 // pred_check
      _
    $region19: #{rmts_classifier_forward.1} parent=1 // pred_check_branch
      %44 = sbr.rel (0) target = $region21
    $region20: #{rmts_classifier_forward.1} parent=1 // pred_region
      _
    $region21: #{rmts_classifier_forward.1} parent=1 // pred_fallthru
      _
    // Predicated region
    $region22: #{rmts_classifier_forward.1} parent=1 // pred_check
      _
    $region23: #{rmts_classifier_forward.1} parent=1 // pred_check_branch
      %46 = sbr.rel (0) target = $region25
    $region24: #{rmts_classifier_forward.1} parent=1 // pred_region
      %48 = vsyncadd [#allocation6], 0
      %s49 = sshll.u32 %s5, 4
      %s50 = int_to_ptr.hbm [resolvable:$true] %s49
      %s51 = sshll.u32 [#allocation7], 4
      %s52 = int_to_ptr.vmem [resolvable:$true] %s51
      %57 = dma.hbm_to_vmem [thread:$0]  %s50, 128, %s52, [#allocation6], 64, 64, 4
    $region25: #{rmts_classifier_forward.1} parent=1 // pred_fallthru
      _
    // Predicated region
    $region26: #{rmts_classifier_forward.1} parent=1 // pred_check
      _
    $region27: #{rmts_classifier_forward.1} parent=1 // pred_check_branch
      %59 = sbr.rel (0) target = $region29
    $region28: #{rmts_classifier_forward.1} parent=1 // pred_region
      _
    $region29: #{rmts_classifier_forward.1} parent=1 // pred_fallthru
      _
    // Predicated region
    $region30: #{rmts_classifier_forward.1} parent=1 // pred_check
      _
    $region31: #{rmts_classifier_forward.1} parent=1 // pred_check_branch
      %61 = sbr.rel (0) target = $region33
    $region32: #{rmts_classifier_forward.1} parent=1 // pred_region
      _
    $region33: #{rmts_classifier_forward.1} parent=1 // pred_fallthru
      _
    // Predicated region
    $region34: #{rmts_classifier_forward.1} parent=1 // pred_check
      _
    $region35: #{rmts_classifier_forward.1} parent=1 // pred_check_branch
      %63 = sbr.rel (0) target = $region37
    $region36: #{rmts_classifier_forward.1} parent=1 // pred_region
      _
    $region37: #{rmts_classifier_forward.1} parent=1 // pred_fallthru
      _
    // Predicated region
    $region38: #{rmts_classifier_forward.1} parent=1 // pred_check
      _
    $region39: #{rmts_classifier_forward.1} parent=1 // pred_check_branch
      %65 = sbr.rel (0) target = $region41
    $region40: #{rmts_classifier_forward.1} parent=1 // pred_region
      %67 = dma.done [#allocation3], 32
    $region41: #{rmts_classifier_forward.1} parent=1 // pred_fallthru
      _
    // Predicated region
    $region42: #{rmts_classifier_forward.1} parent=1 // pred_check
      _
    $region43: #{rmts_classifier_forward.1} parent=1 // pred_check_branch
      %69 = sbr.rel (0) target = $region45
    $region44: #{rmts_classifier_forward.1} parent=1 // pred_region
      %71 = dma.done [#allocation6], 32
    $region45: #{rmts_classifier_forward.1} parent=1 // pred_fallthru
      _
    // Predicated region
    $region46: #{rmts_classifier_forward.1} parent=1 // pred_check
      _
    $region47: #{rmts_classifier_forward.1} parent=1 // pred_check_branch
      %73 = sbr.rel (0) target = $region49
    $region48: #{rmts_classifier_forward.1} parent=1 // pred_region
      %75 = dma.done [#allocation6], 128
    $region49: #{rmts_classifier_forward.1} parent=1 // pred_fallthru
      _
    %v77 = vld [vmem:[#allocation2] sm:$0x3]
    %v78 = vpack.c.bf16 %v77, %v77
    %v79 = vld [vmem:[%s3] sm:$0xf]
    %v80 = vld [vmem:[%s3 + $0x4] sm:$0xf]
    %v81 = vld [vmem:[#allocation5] sm:$0x3]
    %v82 = vpack.c.bf16 %v81, %v81
    %v83 = vld [vmem:[%s4] sm:$0xf]
    %v84 = vld [vmem:[%s4 + $0x4] sm:$0xf]
    %v87 = vunpack.c.l.b16 %v83
    %v88 = vunpack.c.l.b16 %v84
    %v89 = vpack.c.b16 %v88, %v87
    %vm91 = vcmask 130048
    %v93 = vsel %vm91, %v82, 0
    %95 = vmatpush.bf16.msra.mxu0 0
    %96 = vmatpush.bf16.msra.mxu0 0
    %97 = vmatpush.bf16.msra.mxu0 0
    %98 = vmatpush.bf16.msra.mxu0 0
    %99 = vmatpush.bf16.msra.mxu0 0
    %100 = vmatpush.bf16.msra.mxu0 0
    %101 = vmatpush.bf16.msra.mxu0 0
    %102 = vmatpush.bf16.msra.mxu0 %v89
    %103 = vmatmul.bf16.gmra.mxu0 %v93
    %v104 = vpop.f32.mrf.mxu0
    %v105 = vadd.f32 0.0, %v104
    %v106 = vpop.f32.mrf.mxu0
    %107 = vdwg.mxu0
    %v110 = vunpack.c.l.b16 %v79
    %v111 = vunpack.c.l.b16 %v80
    %v112 = vpack.c.b16 %v111, %v110
    %v115 = vsel %vm91, %v78, 0
    %117 = vmatpush.bf16.msra.mxu0 0
    %118 = vmatpush.bf16.msra.mxu0 0
    %119 = vmatpush.bf16.msra.mxu0 0
    %120 = vmatpush.bf16.msra.mxu0 0
    %121 = vmatpush.bf16.msra.mxu0 0
    %122 = vmatpush.bf16.msra.mxu0 0
    %123 = vmatpush.bf16.msra.mxu0 0
    %124 = vmatpush.bf16.msra.mxu0 %v112
    %125 = vmatmul.bf16.gmra.mxu0 %v115
    %v126 = vpop.f32.mrf.mxu0
    %v127 = vadd.f32 %v105, %v126
    %v128 = vpop.f32.mrf.mxu0
    %129 = vdwg.mxu0
    %v130 = vld [vmem:[%s2] sm:$0x3]
    %v131 = vpack.c.bf16 %v130, %v130
    %v132 = vld [vmem:[#allocation7] sm:$0xf]
    %v133 = vld [vmem:[#allocation7 + $0x4] sm:$0xf]
    %v136 = vunpack.c.l.b16 %v132
    %v137 = vunpack.c.l.b16 %v133
    %v138 = vpack.c.b16 %v137, %v136
    %v141 = vsel %vm91, %v131, 0
    %143 = vmatpush.bf16.msra.mxu0 0
    %144 = vmatpush.bf16.msra.mxu0 0
    %145 = vmatpush.bf16.msra.mxu0 0
    %146 = vmatpush.bf16.msra.mxu0 0
    %147 = vmatpush.bf16.msra.mxu0 0
    %148 = vmatpush.bf16.msra.mxu0 0
    %149 = vmatpush.bf16.msra.mxu0 0
    %150 = vmatpush.bf16.msra.mxu0 %v138
    %151 = vmatmul.bf16.gmra.mxu0 %v141
    %v152 = vpop.f32.mrf.mxu0
    %v153 = vadd.f32 0.0, %v152
    %v154 = vpop.f32.mrf.mxu0
    %155 = vdwg.mxu0
    %v156 = vadd.f32 %v127, %v153
    %v157 = vld [vmem:[%s6] sm:$0x1]
    %v159 = vperm.slane %v157, 0
    %v161 = vadd.f32 %v156, %v159
    %v162 = vmax.f32 %v161, 0.0
    %v163 = vpack.c.bf16 %v162, %v162
    %v164 = vld [vmem:[%s7] sm:$0xf]
    %v165 = vld [vmem:[%s7 + $0x4] sm:$0xf]
    %v166 = vld [vmem:[%s7 + $0x8] sm:$0xf]
    %v167 = vld [vmem:[%s7 + $0xc] sm:$0xf]
    %v168 = vld [vmem:[%s8] sm:$0x1]
    %v170 = vperm.slane %v168, 0
    %v176 = vunpack.c.l.b16 %v164
    %v177 = vunpack.c.l.b16 %v165
    %v178 = vunpack.c.l.b16 %v166
    %v179 = vunpack.c.l.b16 %v167
    %v180 = vpack.c.b16 %v177, %v176
    %v181 = vpack.c.b16 %v179, %v178
    %vm184 = vcmask 261120
    %v186 = vsel %vm184, %v163, 0
    %188 = vmatpush.bf16.msra.mxu0 0
    %189 = vmatpush.bf16.msra.mxu0 0
    %190 = vmatpush.bf16.msra.mxu0 0
    %191 = vmatpush.bf16.msra.mxu0 0
    %192 = vmatpush.bf16.msra.mxu0 0
    %193 = vmatpush.bf16.msra.mxu0 0
    %194 = vmatpush.bf16.msra.mxu0 %v181
    %195 = vmatpush.bf16.msra.mxu0 %v180
    %196 = vmatmul.bf16.gmra.mxu0 %v186
    %v197 = vpop.f32.mrf.mxu0
    %v198 = vadd.f32 %v170, %v197
    %v199 = vpop.f32.mrf.mxu0
    %200 = vdwg.mxu0
    %vm201 = vcmask 9216
    %202 = vst.msk [vmem:[#allocation8] sm:$0x3] %vm201, %v198
    // Predicated region
    $region50: #{rmts_classifier_forward.1} parent=1 // pred_check
      _
    $region51: #{rmts_classifier_forward.1} parent=1 // pred_check_branch
      %204 = sbr.rel (0) target = $region53
    $region52: #{rmts_classifier_forward.1} parent=1 // pred_region
      %206 = vsyncadd [#allocation4], 0
      %s208 = sshll.u32 [#allocation8], 4
      %s209 = int_to_ptr.vmem [resolvable:$true] %s208
      %s210 = sshll.u32 %s9, 4
      %s211 = int_to_ptr.hbm [resolvable:$true] %s210
      %213 = dma.vmem_to_hbm [thread:$0]  %s209, 32, %s211, [#allocation4]
    $region53: #{rmts_classifier_forward.1} parent=1 // pred_fallthru
      _
    // Predicated region
    $region54: #{rmts_classifier_forward.1} parent=1 // pred_check
      _
    $region55: #{rmts_classifier_forward.1} parent=1 // pred_check_branch
      %215 = sbr.rel (0) target = $region57
    $region56: #{rmts_classifier_forward.1} parent=1 // pred_region
      %217 = dma.done [#allocation4], 32
    $region57: #{rmts_classifier_forward.1} parent=1 // pred_fallthru
      _
    %218 = vsyncpa [#allocation3], 1
    %219 = vsyncpa [#allocation6], 1
    %220 = vsyncpa [#allocation4], 1

</llo_original>
